<compile_context>
chip_gen: v5e
topology: v5e:2x2
jax: 0.10.0
libtpu: 0.0.40
codegen_flags: <defaults>
</compile_context>

<pallas_src>
import functools

import jax
import jax.numpy as jnp
from jax.experimental import pallas as pl
from jax.experimental.pallas import tpu as pltpu


def _round_up(n, m):
    return ((n + m - 1) // m) * m


def _mlp_kernel(x_ref, w12_ref, b12_ref, w3_ref, b3_ref, o_ref):
    # x_ref: (TB, 512) f32; w12: (512, 256) bf16 (pre-fused fc1@fc2)
    # b12: (1, 256) f32; w3: (1, 256) f32 (fc3 weight as a row); b3: (1, 1) f32
    x = x_ref[...].astype(jnp.bfloat16)  # in-kernel cast: VPU has slack, saves an HBM pass

    # fused fc1+fc2, then ReLU: bf16 MXU with f32 accumulation.
    h = jnp.dot(x, w12_ref[...], preferred_element_type=jnp.float32) + b12_ref[...]
    h = jnp.maximum(h, 0.0)

    # fc3: 1-wide output -> keep it off the MXU; VPU multiply + XLU lane reduce.
    out = jnp.sum(h * w3_ref[...], axis=-1, keepdims=True) + b3_ref[...]
    o_ref[...] = out.astype(o_ref.dtype)


@functools.partial(jax.jit, static_argnames=("tile_b",))
def _forward_impl(x, w12_bf, b12, w3_row, b3, *, tile_b):
    B, D_in = x.shape
    H = w12_bf.shape[1]
    assert D_in == w12_bf.shape[0]

    grid = (pl.cdiv(B, tile_b),)          # partial last block is masked by Pallas
    full = lambda i: (0, 0)               # weights/biases: same full block every step

    flops = 2 * B * (D_in * H + H)
    bytes_accessed = (B * D_in * 4        # x (f32, read once by the kernel)
                      + D_in * H * 2      # W12 (bf16)
                      + (2 * H + 1) * 4   # b12, w3 row, b3 (f32)
                      + B * 4)            # output (f32)

    out = pl.pallas_call(
        _mlp_kernel,
        out_shape=jax.ShapeDtypeStruct((B, 1), jnp.float32),
        grid_spec=pltpu.PrefetchScalarGridSpec(
            num_scalar_prefetch=0,
            grid=grid,
            in_specs=[
                pl.BlockSpec((tile_b, D_in), lambda i: (i, 0)),  # x tile (f32)
                pl.BlockSpec((D_in, H), full),                   # W12 (bf16, fused)
                pl.BlockSpec((1, H), full),                      # b12  (f32, fused)
                pl.BlockSpec((1, H), full),                      # W3 row (f32)
                pl.BlockSpec((1, 1), full),                      # b3   (f32)
            ],
            out_specs=pl.BlockSpec((tile_b, 1), lambda i: (i, 0)),
        ),
        compiler_params=pltpu.CompilerParams(
            dimension_semantics=("parallel",),   # v7x: shard steps across both TCs
            vmem_limit_bytes=48 * 1024 * 1024,   # headroom for 4096-row f32 x tiles
        ),
        cost_estimate=pl.CostEstimate(
            flops=flops, transcendentals=0, bytes_accessed=bytes_accessed),
    )(x, w12_bf, b12, w3_row, b3)

    return out


def nonlinear_regression_forward(x, w12_bf, b12, w3_row, b3, *, tile_b=4096):
    """Forward pass. tile_b = max batch rows per grid step (static, multiple of 8)."""
    B = x.shape[0]
    # Aim for >= 4 grid steps (megacore sharding + DMA/compute overlap) while
    # never exceeding the requested tile; keep the tile a multiple of 8, >= 8.
    want = _round_up(max(pl.cdiv(B, 4), 1), 8)
    eff_tile = max(8, min(_round_up(tile_b, 8), want))
    return _forward_impl(x, w12_bf, b12, w3_row, b3, tile_b=eff_tile)


def init_params(key):
    """Deterministic PyTorch-style init: U(-1/sqrt(fan_in), 1/sqrt(fan_in)).

    Returns the *unfused* f32 parameters (weights pre-transposed to (in, out);
    fc3's weight as a (1, 256) row).
    """
    def linear(key, fan_in, fan_out):
        kw, kb = jax.random.split(key)
        bound = 1.0 / (fan_in ** 0.5)
        w_t = jax.random.uniform(kw, (fan_in, fan_out), jnp.float32, -bound, bound)
        b = jax.random.uniform(kb, (1, fan_out), jnp.float32, -bound, bound)
        return w_t, b

    k1, k2, k3 = jax.random.split(key, 3)
    w1t, b1 = linear(k1, 512, 256)
    w2t, b2 = linear(k2, 256, 256)
    w3t, b3 = linear(k3, 256, 1)
    w3_row = w3t.T  # (1, 256)
    return w1t, b1, w2t, b2, w3_row, b3


def fuse_params(w1t, b1, w2t, b2, w3_row, b3):
    """Fold fc1 into fc2 (no activation between them) once, in f32; W12 -> bf16."""
    w12 = jnp.dot(w1t, w2t, preferred_element_type=jnp.float32)   # (512, 256) f32
    b12 = jnp.dot(b1, w2t, preferred_element_type=jnp.float32) + b2  # (1, 256) f32
    return w12.astype(jnp.bfloat16), b12, w3_row, b3


def reference_forward(x, w1t, b1, w2t, b2, w3_row, b3):
    """Pure-f32 reference matching the PyTorch module (unfused)."""
    h1 = x @ w1t + b1
    h2 = jnp.maximum(h1 @ w2t + b2, 0.0)
    return h2 @ w3_row.T + b3


if __name__ == "__main__":
    key = jax.random.PRNGKey(0)
    k_params, k_x = jax.random.split(key)
    raw_params = init_params(k_params)
    fused_params = fuse_params(*raw_params)

    # Small batch (not a multiple of 8) -> exercises the masked partial final block.
    x_small = jax.random.normal(k_x, (20, 512), jnp.float32)
    out_small = jax.block_until_ready(
        nonlinear_regression_forward(x_small, *fused_params))
    ref_small = reference_forward(x_small, *raw_params)
    assert out_small.shape == (20, 1)
    assert jnp.allclose(out_small, ref_small, atol=3e-2, rtol=3e-2)  # bf16 tolerance

    # Multi-step parallel grid path: 256 rows, tile capped to 64 -> grid=(4,).
    x_multi = jax.random.normal(jax.random.PRNGKey(1), (256, 512), jnp.float32)
    out_multi = jax.block_until_ready(
        nonlinear_regression_forward(x_multi, *fused_params, tile_b=128))
    ref_multi = reference_forward(x_multi, *raw_params)
    assert out_multi.shape == (256, 1)
    assert jnp.allclose(out_multi, ref_multi, atol=3e-2, rtol=3e-2)

    print("KERNEL_OK")
</pallas_src>

<mosaic_0001>
module attributes {stable_mosaic.version = 11 : i64} {
  func.func @_mlp_kernel(%arg0: i32, %arg1: memref<8x512xf32, #tpu.memory_space<vmem>>, %arg2: memref<512x256xbf16, #tpu.memory_space<vmem>>, %arg3: memref<1x256xf32, #tpu.memory_space<vmem>>, %arg4: memref<1x256xf32, #tpu.memory_space<vmem>>, %arg5: memref<1x1xf32, #tpu.memory_space<vmem>>, %arg6: memref<8x1xf32, #tpu.memory_space<vmem>>) attributes {dimension_semantics = [#tpu.dimension_semantics<parallel>], iteration_bounds = array<i64: 3>, scalar_prefetch = 0 : i64, scratch_operands = 0 : i64, tpu.core_type = #tpu.core_type<tc>, window_params = [{transform_indices = @transform_0, window_bounds = array<i64: 8, 512>}, {pipeline_mode = #tpu.pipeline_mode<synchronous>, transform_indices = @transform_1, window_bounds = array<i64: 512, 256>}, {pipeline_mode = #tpu.pipeline_mode<synchronous>, transform_indices = @transform_2, window_bounds = array<i64: 1, 256>}, {pipeline_mode = #tpu.pipeline_mode<synchronous>, transform_indices = @transform_3, window_bounds = array<i64: 1, 256>}, {pipeline_mode = #tpu.pipeline_mode<synchronous>, transform_indices = @transform_4, window_bounds = array<i64: 1, 1>}, {transform_indices = @transform_5, window_bounds = array<i64: 8, 1>}]} {
    %c0 = arith.constant 0 : index
    %c0_0 = arith.constant 0 : index
    %0 = vector.load %arg1[%c0, %c0_0] : memref<8x512xf32, #tpu.memory_space<vmem>>, vector<8x512xf32>
    %1 = arith.truncf %0 : vector<8x512xf32> to vector<8x512xbf16>
    %c0_1 = arith.constant 0 : index
    %c0_2 = arith.constant 0 : index
    %2 = vector.load %arg2[%c0_1, %c0_2] : memref<512x256xbf16, #tpu.memory_space<vmem>>, vector<512x256xbf16>
    %cst = arith.constant dense<0.000000e+00> : vector<8x256xf32>
    %3 = tpu.matmul %1, %2, %cst {dimension_numbers = #tpu.dot_dimension_numbers<[1], [0], [0], [1], [0, 0, 1, 1], [], []>} : vector<8x512xbf16>, vector<512x256xbf16>, vector<8x256xf32> -> vector<8x256xf32>
    %c0_3 = arith.constant 0 : index
    %c0_4 = arith.constant 0 : index
    %4 = vector.load %arg3[%c0_3, %c0_4] : memref<1x256xf32, #tpu.memory_space<vmem>>, vector<1x256xf32>
    %5 = vector.broadcast %4 : vector<1x256xf32> to vector<8x256xf32>
    %6 = arith.addf %3, %5 : vector<8x256xf32>
    %cst_5 = arith.constant 0.000000e+00 : f32
    %7 = vector.broadcast %cst_5 : f32 to vector<8x256xf32>
    %8 = arith.maximumf %6, %7 : vector<8x256xf32>
    %c0_6 = arith.constant 0 : index
    %c0_7 = arith.constant 0 : index
    %9 = vector.load %arg4[%c0_6, %c0_7] : memref<1x256xf32, #tpu.memory_space<vmem>>, vector<1x256xf32>
    %10 = vector.broadcast %9 : vector<1x256xf32> to vector<8x256xf32>
    %11 = arith.mulf %8, %10 : vector<8x256xf32>
    %cst_8 = arith.constant dense<0.000000e+00> : vector<8xf32>
    %12 = vector.multi_reduction <add>, %11, %cst_8 [1] : vector<8x256xf32> to vector<8xf32>
    %13 = vector.shape_cast %12 : vector<8xf32> to vector<8x1xf32>
    %c0_9 = arith.constant 0 : index
    %c0_10 = arith.constant 0 : index
    %14 = vector.load %arg5[%c0_9, %c0_10] : memref<1x1xf32, #tpu.memory_space<vmem>>, vector<1x1xf32>
    %15 = vector.broadcast %14 : vector<1x1xf32> to vector<8x1xf32>
    %16 = arith.addf %13, %15 : vector<8x1xf32>
    %c0_11 = arith.constant 0 : index
    %c0_12 = arith.constant 0 : index
    %17 = vector.load %arg6[%c0_11, %c0_12] : memref<8x1xf32, #tpu.memory_space<vmem>>, vector<8x1xf32>
    tpu.vector_store %arg6[%c0_11, %c0_12], %16 {strides = array<i32>} : memref<8x1xf32, #tpu.memory_space<vmem>>, vector<8x1xf32>,
    return
  }
  func.func @transform_0(%arg0: i32) -> (i32, i32) {
    %c0_i32 = arith.constant 0 : i32
    %c0_i32_0 = arith.constant 0 : i32
    return %arg0, %c0_i32 : i32, i32
  }
  func.func @transform_1(%arg0: i32) -> (i32, i32) {
    %c0_i32 = arith.constant 0 : i32
    %c0_i32_0 = arith.constant 0 : i32
    %c0_i32_1 = arith.constant 0 : i32
    return %c0_i32, %c0_i32_0 : i32, i32
  }
  func.func @transform_2(%arg0: i32) -> (i32, i32) {
    %c0_i32 = arith.constant 0 : i32
    %c0_i32_0 = arith.constant 0 : i32
    %c0_i32_1 = arith.constant 0 : i32
    return %c0_i32, %c0_i32_0 : i32, i32
  }
  func.func @transform_3(%arg0: i32) -> (i32, i32) {
    %c0_i32 = arith.constant 0 : i32
    %c0_i32_0 = arith.constant 0 : i32
    %c0_i32_1 = arith.constant 0 : i32
    return %c0_i32, %c0_i32_0 : i32, i32
  }
  func.func @transform_4(%arg0: i32) -> (i32, i32) {
    %c0_i32 = arith.constant 0 : i32
    %c0_i32_0 = arith.constant 0 : i32
    %c0_i32_1 = arith.constant 0 : i32
    return %c0_i32, %c0_i32_0 : i32, i32
  }
  func.func @transform_5(%arg0: i32) -> (i32, i32) {
    %c0_i32 = arith.constant 0 : i32
    %c0_i32_0 = arith.constant 0 : i32
    return %arg0, %c0_i32 : i32, i32
  }
}

</mosaic_0001>

<llo_original>
// kernel: _forward_impl.1
$region0: #{_forward_impl.1}
  #allocation0 [shape = 'u32[]', space=smem, size = 0x4, offset = 0x4, fixed_abs, tag = 'smem constant byte address 0x4 - core index']
  #allocation1 [shape = 'u32[72,128]{1,0:T(1,128)}', space=vmem, size = 0x9000, scoped, tag = 'internal scratch']
  #allocation2 [shape = 'f32[1,1]{1,0:T(1,128)S(1)}', space=vmem, size = 0x200, scoped, tag = 'scoped memory for _forward_impl.1']
  %s0 = inlined_call_operand.hbm [shape: f32[20,512], index: 0, kind: input, shape index: {}]
  %s1 = inlined_call_operand.hbm [shape: bf16[512,256], index: 1, kind: input, shape index: {}]
  %s2 = inlined_call_operand.vmem [shape: f32[1,256], index: 2, kind: input, shape index: {}]
  %s3 = inlined_call_operand.vmem [shape: f32[1,256], index: 3, kind: input, shape index: {}]
  %s4 = inlined_call_operand.<no memory space> [shape: f32[1,1], index: 4, kind: input, shape index: {}]
  %s5 = inlined_call_operand.vmem [shape: f32[20,1], index: 5, kind: output, shape index: {}]
  %s6 = sld [smem:[#allocation0]]
  $region61: #{_forward_impl.1} parent=0
    _
  %s8 = ssub.s32 1, %s6
  %s9 = scalar_select 0, %s8, %s6
  %v10 = vstv %s4
  %11 = vst [vmem:[#allocation2] sm:$0x1] %v10
  $region1: #{_forward_impl.1} parent=0
    #allocation3 [shape = 'u8[32768]{0}', space=vmem, size = 0x8000, scoped, tag = 'input window, operand 0']
    #allocation4 [shape = 's32[2]{0}', space=sflag, size = 0x8, scoped, tag = 'scoped memory for _forward_impl.1']
    #allocation5 [shape = 'u8[262144]{0}', space=vmem, size = 0x40000, scoped, tag = 'input window, operand 1, single buffered']
    #allocation6 [shape = 's32[1]{0}', space=sflag, size = 0x4, scoped, tag = 'scoped memory for _forward_impl.1']
    %12 = vsyncpa [#allocation4], 0
    %s13 = scalar_lea.sflag [#allocation4], 1
    %14 = vsyncpa %s13, 0
    %15 = vsyncpa [#allocation6], 0
    loop: start=0, step=1, limit=5
    $region2: #{_forward_impl.1} parent=1 // loop_pre_header
      _
    $region3: #{_forward_impl.1} parent=1 // loop_header
      %s17 = sphi 0, %s21
      %p18 = scmp.ge.s32.totalorder %s17, 5
      %s27 = sphi 0, %s29
      %s30 = sphi 0, %s27
      %s31 = sphi 0, %s30
      %s47 = sphi 0, %s31
      %s51 = sphi 0, %s51
      %s53 = sphi 0, %s51
      %s54 = sphi 0, %s53
      %s68 = sphi 0, %s54
      %s72 = sphi 0, %s72
      %s74 = sphi 0, %s72
      %s75 = sphi 0, %s74
      %s89 = sphi 0, %s75
      %s93 = sphi 0, %s93
      %s95 = sphi 0, %s93
      %s96 = sphi 0, %s95
      %s110 = sphi 0, %s96
      %s114 = sphi 0, %s114
      %s116 = sphi 0, %s114
      %s117 = sphi 0, %s116
      %s131 = sphi 0, %s117
      %s137 = sphi 0, %s139
      %s140 = sphi 0, %s137
      %s141 = sphi 0, %s140
      %s157 = sphi 0, %s141
    $region4: #{_forward_impl.1} parent=1 // loop_header_branch
      %20 = sbr.rel (%p18) target = $region8
    $region5: #{_forward_impl.1} parent=1 // loop_body
      %s22 = ssub.s32 %s17, 1
      %s23 = ssub.s32 %s17, 2
      %s24 = sadd.s32 %s17, 1
      %s25 = ssub.s32 %s17, %s24
      %p26 = scmp.eq.s32.totalorder %s25, 0
      %s28 = sadd.s32 %s27, 1
      %s29 = scalar_select %p26, %s27, %s28
      %p32 = pneg %p26
      %p33 = scmp.eq.s32.totalorder %s17, 2
      %p34 = por %p32, %p33
      %p35 = scmp.ne.s32.totalorder %s27, %s30
      %p36 = scmp.eq.s32.totalorder %s17, 0
      %p37 = por %p35, %p36
      %p38 = scmp.ne.s32.totalorder %s27, %s30
      %p39 = scmp.eq.s32.totalorder %s22, 2
      %p40 = por %p38, %p39
      %p41 = scmp.ne.s32.totalorder %s30, %s31
      %p42 = scmp.eq.s32.totalorder %s22, 0
      %p43 = por %p41, %p42
      %p44 = scmp.ne.s32.totalorder %s30, %s31
      %p45 = scmp.eq.s32.totalorder %s23, 2
      %p46 = por %p44, %p45
      %p48 = scmp.ne.s32.totalorder %s31, %s47
      %p49 = scmp.eq.s32.totalorder %s23, 0
      %p50 = por %p48, %p49
      %s52 = sadd.s32 %s51, 1
      %p55 = scmp.eq.s32.totalorder %s17, 2
      %p56 = scmp.ne.s32.totalorder %s51, %s53
      %p57 = scmp.eq.s32.totalorder %s17, 0
      %p58 = por %p56, %p57
      %p59 = scmp.ne.s32.totalorder %s51, %s53
      %p60 = scmp.eq.s32.totalorder %s22, 2
      %p61 = por %p59, %p60
      %p62 = scmp.ne.s32.totalorder %s53, %s54
      %p63 = scmp.eq.s32.totalorder %s22, 0
      %p64 = por %p62, %p63
      %p65 = scmp.ne.s32.totalorder %s53, %s54
      %p66 = scmp.eq.s32.totalorder %s23, 2
      %p67 = por %p65, %p66
      %p69 = scmp.ne.s32.totalorder %s54, %s68
      %p70 = scmp.eq.s32.totalorder %s23, 0
      %p71 = por %p69, %p70
      %s73 = sadd.s32 %s72, 1
      %p76 = scmp.eq.s32.totalorder %s17, 2
      %p77 = scmp.ne.s32.totalorder %s72, %s74
      %p78 = scmp.eq.s32.totalorder %s17, 0
      %p79 = por %p77, %p78
      %p80 = scmp.ne.s32.totalorder %s72, %s74
      %p81 = scmp.eq.s32.totalorder %s22, 2
      %p82 = por %p80, %p81
      %p83 = scmp.ne.s32.totalorder %s74, %s75
      %p84 = scmp.eq.s32.totalorder %s22, 0
      %p85 = por %p83, %p84
      %p86 = scmp.ne.s32.totalorder %s74, %s75
      %p87 = scmp.eq.s32.totalorder %s23, 2
      %p88 = por %p86, %p87
      %p90 = scmp.ne.s32.totalorder %s75, %s89
      %p91 = scmp.eq.s32.totalorder %s23, 0
      %p92 = por %p90, %p91
      %s94 = sadd.s32 %s93, 1
      %p97 = scmp.eq.s32.totalorder %s17, 2
      %p98 = scmp.ne.s32.totalorder %s93, %s95
      %p99 = scmp.eq.s32.totalorder %s17, 0
      %p100 = por %p98, %p99
      %p101 = scmp.ne.s32.totalorder %s93, %s95
      %p102 = scmp.eq.s32.totalorder %s22, 2
      %p103 = por %p101, %p102
      %p104 = scmp.ne.s32.totalorder %s95, %s96
      %p105 = scmp.eq.s32.totalorder %s22, 0
      %p106 = por %p104, %p105
      %p107 = scmp.ne.s32.totalorder %s95, %s96
      %p108 = scmp.eq.s32.totalorder %s23, 2
      %p109 = por %p107, %p108
      %p111 = scmp.ne.s32.totalorder %s96, %s110
      %p112 = scmp.eq.s32.totalorder %s23, 0
      %p113 = por %p111, %p112
      %s115 = sadd.s32 %s114, 1
      %p118 = scmp.eq.s32.totalorder %s17, 2
      %p119 = scmp.ne.s32.totalorder %s114, %s116
      %p120 = scmp.eq.s32.totalorder %s17, 0
      %p121 = por %p119, %p120
      %p122 = scmp.ne.s32.totalorder %s114, %s116
      %p123 = scmp.eq.s32.totalorder %s22, 2
      %p124 = por %p122, %p123
      %p125 = scmp.ne.s32.totalorder %s116, %s117
      %p126 = scmp.eq.s32.totalorder %s22, 0
      %p127 = por %p125, %p126
      %p128 = scmp.ne.s32.totalorder %s116, %s117
      %p129 = scmp.eq.s32.totalorder %s23, 2
      %p130 = por %p128, %p129
      %p132 = scmp.ne.s32.totalorder %s117, %s131
      %p133 = scmp.eq.s32.totalorder %s23, 0
      %p134 = por %p132, %p133
      %s135 = ssub.s32 %s17, %s24
      %p136 = scmp.eq.s32.totalorder %s135, 0
      %s138 = sadd.s32 %s137, 1
      %s139 = scalar_select %p136, %s137, %s138
      %p142 = pneg %p136
      %p143 = scmp.eq.s32.totalorder %s17, 2
      %p144 = por %p142, %p143
      %p145 = scmp.ne.s32.totalorder %s137, %s140
      %p146 = scmp.eq.s32.totalorder %s17, 0
      %p147 = por %p145, %p146
      %p148 = scmp.ne.s32.totalorder %s137, %s140
      %p149 = scmp.eq.s32.totalorder %s22, 2
      %p150 = por %p148, %p149
      %p151 = scmp.ne.s32.totalorder %s140, %s141
      %p152 = scmp.eq.s32.totalorder %s22, 0
      %p153 = por %p151, %p152
      %p154 = scmp.ne.s32.totalorder %s140, %s141
      %p155 = scmp.eq.s32.totalorder %s23, 2
      %p156 = por %p154, %p155
      %p158 = scmp.ne.s32.totalorder %s141, %s157
      %p159 = scmp.eq.s32.totalorder %s23, 0
      %p160 = por %p158, %p159
      %p161 = scmp.le.s32.totalorder 1, %s17
      %p162 = scmp.lt.s32.totalorder %s17, 4
      %p163 = pnand %p161, %p162
      %p164 = pneg %p163
      // Predicated region
      $region9: #{_forward_impl.1} parent=5 // pred_check
        _
      $region10: #{_forward_impl.1} parent=5 // pred_check_branch
        %166 = sbr.rel (%p163) target = $region12
      $region11: #{_forward_impl.1} parent=5 // pred_region
        %s167 = ssub.s32 %s17, 1
        // Predicated region
        $region13: #{_forward_impl.1} parent=11 // pred_check
          %p168 = pneg %p64
        $region14: #{_forward_impl.1} parent=11 // pred_check_branch
          %170 = sbr.rel (%p168) target = $region16
        $region15: #{_forward_impl.1} parent=11 // pred_region
          %172 = vsyncadd [#allocation6], 0
          %s173 = sshll.u32 %s1, 4
          %s174 = int_to_ptr.hbm [resolvable:$true] %s173
          %s175 = sshll.u32 [#allocation5], 4
          %s176 = int_to_ptr.vmem [resolvable:$true] %s175
          %181 = dma.hbm_to_vmem [thread:$0]  %s174, 8192, %s176, [#allocation6], 128, 128, 8
        $region16: #{_forward_impl.1} parent=11 // pred_fallthru
          _
        // Predicated region
        $region17: #{_forward_impl.1} parent=11 // pred_check
          %p182 = pneg %p85
        $region18: #{_forward_impl.1} parent=11 // pred_check_branch
          %184 = sbr.rel (%p182) target = $region20
        $region19: #{_forward_impl.1} parent=11 // pred_region
          _
        $region20: #{_forward_impl.1} parent=11 // pred_fallthru
          _
        // Predicated region
        $region21: #{_forward_impl.1} parent=11 // pred_check
          %p185 = pneg %p106
        $region22: #{_forward_impl.1} parent=11 // pred_check_branch
          %187 = sbr.rel (%p185) target = $region24
        $region23: #{_forward_impl.1} parent=11 // pred_region
          _
        $region24: #{_forward_impl.1} parent=11 // pred_fallthru
          _
        // Predicated region
        $region25: #{_forward_impl.1} parent=11 // pred_check
          %p188 = pneg %p127
        $region26: #{_forward_impl.1} parent=11 // pred_check_branch
          %190 = sbr.rel (%p188) target = $region28
        $region27: #{_forward_impl.1} parent=11 // pred_region
          _
        $region28: #{_forward_impl.1} parent=11 // pred_fallthru
          _
      $region12: #{_forward_impl.1} parent=5 // pred_fallthru
        _
      %p191 = scmp.lt.s32.totalorder %s17, 3
      // Predicated region
      $region29: #{_forward_impl.1} parent=5 // pred_check
        %p192 = pneg %p191
      $region30: #{_forward_impl.1} parent=5 // pred_check_branch
        %194 = sbr.rel (%p192) target = $region32
      $region31: #{_forward_impl.1} parent=5 // pred_region
        // Predicated region
        $region33: #{_forward_impl.1} parent=31 // pred_check
          %p195 = pneg %p37
        $region34: #{_forward_impl.1} parent=31 // pred_check_branch
          %197 = sbr.rel (%p195) target = $region36
        $region35: #{_forward_impl.1} parent=31 // pred_region
          %s198 = sand.u32 %s27, 1
          %s199 = scalar_lea.sflag [#allocation4], %s198
          %s200 = sand.u32 %s27, 1
          %s201 = smul.addr %s200, 32
          %s202 = scalar_lea.vmem [#allocation3], %s201
          %204 = vsyncadd %s199, 0
          %s205 = smul.addr %s17, 4
          %s206 = smul.addr %s205, 8
          %s207 = scalar_lea.hbm %s0, %s206
          %s209 = sshll.u32 %s207, 4
          %s210 = int_to_ptr.hbm [resolvable:$true] %s209
          %s211 = sshll.u32 %s202, 4
          %s212 = int_to_ptr.vmem [resolvable:$true] %s211
          %214 = dma.hbm_to_vmem [thread:$0]  %s210, 512, %s212, %s199
        $region36: #{_forward_impl.1} parent=31 // pred_fallthru
          _
      $region32: #{_forward_impl.1} parent=5 // pred_fallthru
        _
      %p215 = scmp.le.s32.totalorder 1, %s17
      %p216 = scmp.lt.s32.totalorder %s17, 4
      %p217 = pnand %p215, %p216
      %p218 = pneg %p217
      // Predicated region
      $region37: #{_forward_impl.1} parent=5 // pred_check
        _
      $region38: #{_forward_impl.1} parent=5 // pred_check_branch
        %220 = sbr.rel (%p217) target = $region40
      $region39: #{_forward_impl.1} parent=5 // pred_region
        %s221 = ssub.s32 %s17, 1
        %s222 = sand.u32 %s30, 1
        %s223 = scalar_lea.sflag [#allocation4], %s222
        %s224 = sand.u32 %s30, 1
        %s225 = smul.addr %s224, 32
        %s226 = scalar_lea.vmem [#allocation3], %s225
        // Predicated region
        $region41: #{_forward_impl.1} parent=39 // pred_check
          %p227 = pneg %p43
        $region42: #{_forward_impl.1} parent=39 // pred_check_branch
          %229 = sbr.rel (%p227) target = $region44
        $region43: #{_forward_impl.1} parent=39 // pred_region
          %231 = dma.done %s223, 512
        $region44: #{_forward_impl.1} parent=39 // pred_fallthru
          _
        // Predicated region
        $region45: #{_forward_impl.1} parent=39 // pred_check
          %p232 = pneg %p64
        $region46: #{_forward_impl.1} parent=39 // pred_check_branch
          %234 = sbr.rel (%p232) target = $region48
        $region47: #{_forward_impl.1} parent=39 // pred_region
          %236 = dma.done [#allocation6], 8192
        $region48: #{_forward_impl.1} parent=39 // pred_fallthru
          _
        %s237 = sand.u32 %s30, 1
        %s238 = scalar_lea.sflag [#allocation4], %s237
        %s239 = sand.u32 %s30, 1
        %s240 = smul.addr %s239, 32
        %s241 = scalar_lea.vmem [#allocation3], %s240
        %p242 = pneg %p43
        %p243 = pneg %p40
        %p244 = pneg %p64
        %p245 = pneg %p61
        %p246 = pneg %p85
        %p247 = pneg %p82
        %p248 = pneg %p106
        %p249 = pneg %p103
        %p250 = pneg %p127
        %p251 = pneg %p124
        %p252 = pneg %p153
        %p253 = pneg %p150
        %p254 = scmp.lt.s32.totalorder %s22, 2
        %s255 = scalar_select %p254, %s22, 2
        %s256 = smul.addr %s255, 8
        %s257 = scalar_lea.vmem %s5, %s256
        %p258 = scmp.lt.s32.totalorder %s22, 2
        %s259 = scalar_select %p258, %s22, 2
        %s260 = smul.addr %s259, 8
        %s261 = scalar_lea.vmem %s5, %s260
        %v262 = vld [vmem:[%s226] sm:$0xff]
        %v263 = vld [vmem:[%s226 + $0x8] sm:$0xff]
        %v264 = vld [vmem:[%s226 + $0x10] sm:$0xff]
        %v265 = vld [vmem:[%s226 + $0x18] sm:$0xff]
        %v266 = vpack.c.bf16 %v262, %v262
        %v267 = vpack.c.bf16 %v263, %v263
        %v268 = vpack.c.bf16 %v264, %v264
        %v269 = vpack.c.bf16 %v265, %v265
        %v270 = vld [vmem:[#allocation5] sm:$0xff]
        %v271 = vld [vmem:[#allocation5 + $0x8] sm:$0xff]
        %v272 = vld [vmem:[#allocation5 + $0x10] sm:$0xff]
        %v273 = vld [vmem:[#allocation5 + $0x18] sm:$0xff]
        %v274 = vld [vmem:[#allocation5 + $0x20] sm:$0xff]
        %v275 = vld [vmem:[#allocation5 + $0x28] sm:$0xff]
        %v276 = vld [vmem:[#allocation5 + $0x30] sm:$0xff]
        %v277 = vld [vmem:[#allocation5 + $0x38] sm:$0xff]
        %v278 = vld [vmem:[#allocation5 + $0x40] sm:$0xff]
        %v279 = vld [vmem:[#allocation5 + $0x48] sm:$0xff]
        %v280 = vld [vmem:[#allocation5 + $0x50] sm:$0xff]
        %v281 = vld [vmem:[#allocation5 + $0x58] sm:$0xff]
        %v282 = vld [vmem:[#allocation5 + $0x60] sm:$0xff]
        %v283 = vld [vmem:[#allocation5 + $0x68] sm:$0xff]
        %v284 = vld [vmem:[#allocation5 + $0x70] sm:$0xff]
        %v285 = vld [vmem:[#allocation5 + $0x78] sm:$0xff]
        %v286 = vld [vmem:[#allocation5 + $0x80] sm:$0xff]
        %v287 = vld [vmem:[#allocation5 + $0x88] sm:$0xff]
        %v288 = vld [vmem:[#allocation5 + $0x90] sm:$0xff]
        %v289 = vld [vmem:[#allocation5 + $0x98] sm:$0xff]
        %v290 = vld [vmem:[#allocation5 + $0xa0] sm:$0xff]
        %v291 = vld [vmem:[#allocation5 + $0xa8] sm:$0xff]
        %v292 = vld [vmem:[#allocation5 + $0xb0] sm:$0xff]
        %v293 = vld [vmem:[#allocation5 + $0xb8] sm:$0xff]
        %v294 = vld [vmem:[#allocation5 + $0xc0] sm:$0xff]
        %v295 = vld [vmem:[#allocation5 + $0xc8] sm:$0xff]
        %v296 = vld [vmem:[#allocation5 + $0xd0] sm:$0xff]
        %v297 = vld [vmem:[#allocation5 + $0xd8] sm:$0xff]
        %v298 = vld [vmem:[#allocation5 + $0xe0] sm:$0xff]
        %v299 = vld [vmem:[#allocation5 + $0xe8] sm:$0xff]
        %v300 = vld [vmem:[#allocation5 + $0xf0] sm:$0xff]
        %v301 = vld [vmem:[#allocation5 + $0xf8] sm:$0xff]
        %v302 = vld [vmem:[#allocation5 + $0x100] sm:$0xff]
        %v303 = vld [vmem:[#allocation5 + $0x108] sm:$0xff]
        %v304 = vld [vmem:[#allocation5 + $0x110] sm:$0xff]
        %v305 = vld [vmem:[#allocation5 + $0x118] sm:$0xff]
        %v306 = vld [vmem:[#allocation5 + $0x120] sm:$0xff]
        %v307 = vld [vmem:[#allocation5 + $0x128] sm:$0xff]
        %v308 = vld [vmem:[#allocation5 + $0x130] sm:$0xff]
        %v309 = vld [vmem:[#allocation5 + $0x138] sm:$0xff]
        %v310 = vld [vmem:[#allocation5 + $0x140] sm:$0xff]
        %v311 = vld [vmem:[#allocation5 + $0x148] sm:$0xff]
        %v312 = vld [vmem:[#allocation5 + $0x150] sm:$0xff]
        %v313 = vld [vmem:[#allocation5 + $0x158] sm:$0xff]
        %v314 = vld [vmem:[#allocation5 + $0x160] sm:$0xff]
        %v315 = vld [vmem:[#allocation5 + $0x168] sm:$0xff]
        %v316 = vld [vmem:[#allocation5 + $0x170] sm:$0xff]
        %v317 = vld [vmem:[#allocation5 + $0x178] sm:$0xff]
        %v318 = vld [vmem:[#allocation5 + $0x180] sm:$0xff]
        %v319 = vld [vmem:[#allocation5 + $0x188] sm:$0xff]
        %v320 = vld [vmem:[#allocation5 + $0x190] sm:$0xff]
        %v321 = vld [vmem:[#allocation5 + $0x198] sm:$0xff]
        %v322 = vld [vmem:[#allocation5 + $0x1a0] sm:$0xff]
        %v323 = vld [vmem:[#allocation5 + $0x1a8] sm:$0xff]
        %v324 = vld [vmem:[#allocation5 + $0x1b0] sm:$0xff]
        %v325 = vld [vmem:[#allocation5 + $0x1b8] sm:$0xff]
        %v326 = vld [vmem:[#allocation5 + $0x1c0] sm:$0xff]
        %v327 = vld [vmem:[#allocation5 + $0x1c8] sm:$0xff]
        %v328 = vld [vmem:[#allocation5 + $0x1d0] sm:$0xff]
        %v329 = vld [vmem:[#allocation5 + $0x1d8] sm:$0xff]
        %v330 = vld [vmem:[#allocation5 + $0x1e0] sm:$0xff]
        %v331 = vld [vmem:[#allocation5 + $0x1e8] sm:$0xff]
        %v332 = vld [vmem:[#allocation5 + $0x1f0] sm:$0xff]
        %v333 = vld [vmem:[#allocation5 + $0x1f8] sm:$0xff]
        %v334 = vld [vmem:[%s2] sm:$0x3]
        %v336 = vperm.slane %v334, 0
        %v337 = vperm.slane %v334, 1
        %v404 = vunpack.c.l.b16 %v270
        %v405 = vunpack.c.h.b16 %v270
        %v406 = vunpack.c.l.b16 %v271
        %v407 = vunpack.c.h.b16 %v271
        %v408 = vunpack.c.l.b16 %v272
        %v409 = vunpack.c.h.b16 %v272
        %v410 = vunpack.c.l.b16 %v273
        %v411 = vunpack.c.h.b16 %v273
        %v412 = vunpack.c.l.b16 %v274
        %v413 = vunpack.c.h.b16 %v274
        %v414 = vunpack.c.l.b16 %v275
        %v415 = vunpack.c.h.b16 %v275
        %v416 = vunpack.c.l.b16 %v276
        %v417 = vunpack.c.h.b16 %v276
        %v418 = vunpack.c.l.b16 %v277
        %v419 = vunpack.c.h.b16 %v277
        %v420 = vunpack.c.l.b16 %v278
        %v421 = vunpack.c.h.b16 %v278
        %v422 = vunpack.c.l.b16 %v279
        %v423 = vunpack.c.h.b16 %v279
        %v424 = vunpack.c.l.b16 %v280
        %v425 = vunpack.c.h.b16 %v280
        %v426 = vunpack.c.l.b16 %v281
        %v427 = vunpack.c.h.b16 %v281
        %v428 = vunpack.c.l.b16 %v282
        %v429 = vunpack.c.h.b16 %v282
        %v430 = vunpack.c.l.b16 %v283
        %v431 = vunpack.c.h.b16 %v283
        %v432 = vunpack.c.l.b16 %v284
        %v433 = vunpack.c.h.b16 %v284
        %v434 = vunpack.c.l.b16 %v285
        %v435 = vunpack.c.h.b16 %v285
        %v436 = vunpack.c.l.b16 %v286
        %v437 = vunpack.c.h.b16 %v286
        %v438 = vunpack.c.l.b16 %v287
        %v439 = vunpack.c.h.b16 %v287
        %v440 = vunpack.c.l.b16 %v288
        %v441 = vunpack.c.h.b16 %v288
        %v442 = vunpack.c.l.b16 %v289
        %v443 = vunpack.c.h.b16 %v289
        %v444 = vunpack.c.l.b16 %v290
        %v445 = vunpack.c.h.b16 %v290
        %v446 = vunpack.c.l.b16 %v291
        %v447 = vunpack.c.h.b16 %v291
        %v448 = vunpack.c.l.b16 %v292
        %v449 = vunpack.c.h.b16 %v292
        %v450 = vunpack.c.l.b16 %v293
        %v451 = vunpack.c.h.b16 %v293
        %v452 = vunpack.c.l.b16 %v294
        %v453 = vunpack.c.h.b16 %v294
        %v454 = vunpack.c.l.b16 %v295
        %v455 = vunpack.c.h.b16 %v295
        %v456 = vunpack.c.l.b16 %v296
        %v457 = vunpack.c.h.b16 %v296
        %v458 = vunpack.c.l.b16 %v297
        %v459 = vunpack.c.h.b16 %v297
        %v460 = vunpack.c.l.b16 %v298
        %v461 = vunpack.c.h.b16 %v298
        %v462 = vunpack.c.l.b16 %v299
        %v463 = vunpack.c.h.b16 %v299
        %v464 = vunpack.c.l.b16 %v300
        %v465 = vunpack.c.h.b16 %v300
        %v466 = vunpack.c.l.b16 %v301
        %v467 = vunpack.c.h.b16 %v301
        %v468 = vunpack.c.l.b16 %v302
        %v469 = vunpack.c.h.b16 %v302
        %v470 = vunpack.c.l.b16 %v303
        %v471 = vunpack.c.h.b16 %v303
        %v472 = vunpack.c.l.b16 %v304
        %v473 = vunpack.c.h.b16 %v304
        %v474 = vunpack.c.l.b16 %v305
        %v475 = vunpack.c.h.b16 %v305
        %v476 = vunpack.c.l.b16 %v306
        %v477 = vunpack.c.h.b16 %v306
        %v478 = vunpack.c.l.b16 %v307
        %v479 = vunpack.c.h.b16 %v307
        %v480 = vunpack.c.l.b16 %v308
        %v481 = vunpack.c.h.b16 %v308
        %v482 = vunpack.c.l.b16 %v309
        %v483 = vunpack.c.h.b16 %v309
        %v484 = vunpack.c.l.b16 %v310
        %v485 = vunpack.c.h.b16 %v310
        %v486 = vunpack.c.l.b16 %v311
        %v487 = vunpack.c.h.b16 %v311
        %v488 = vunpack.c.l.b16 %v312
        %v489 = vunpack.c.h.b16 %v312
        %v490 = vunpack.c.l.b16 %v313
        %v491 = vunpack.c.h.b16 %v313
        %v492 = vunpack.c.l.b16 %v314
        %v493 = vunpack.c.h.b16 %v314
        %v494 = vunpack.c.l.b16 %v315
        %v495 = vunpack.c.h.b16 %v315
        %v496 = vunpack.c.l.b16 %v316
        %v497 = vunpack.c.h.b16 %v316
        %v498 = vunpack.c.l.b16 %v317
        %v499 = vunpack.c.h.b16 %v317
        %v500 = vunpack.c.l.b16 %v318
        %v501 = vunpack.c.h.b16 %v318
        %v502 = vunpack.c.l.b16 %v319
        %v503 = vunpack.c.h.b16 %v319
        %v504 = vunpack.c.l.b16 %v320
        %v505 = vunpack.c.h.b16 %v320
        %v506 = vunpack.c.l.b16 %v321
        %v507 = vunpack.c.h.b16 %v321
        %v508 = vunpack.c.l.b16 %v322
        %v509 = vunpack.c.h.b16 %v322
        %v510 = vunpack.c.l.b16 %v323
        %v511 = vunpack.c.h.b16 %v323
        %v512 = vunpack.c.l.b16 %v324
        %v513 = vunpack.c.h.b16 %v324
        %v514 = vunpack.c.l.b16 %v325
        %v515 = vunpack.c.h.b16 %v325
        %v516 = vunpack.c.l.b16 %v326
        %v517 = vunpack.c.h.b16 %v326
        %v518 = vunpack.c.l.b16 %v327
        %v519 = vunpack.c.h.b16 %v327
        %v520 = vunpack.c.l.b16 %v328
        %v521 = vunpack.c.h.b16 %v328
        %v522 = vunpack.c.l.b16 %v329
        %v523 = vunpack.c.h.b16 %v329
        %v524 = vunpack.c.l.b16 %v330
        %v525 = vunpack.c.h.b16 %v330
        %v526 = vunpack.c.l.b16 %v331
        %v527 = vunpack.c.h.b16 %v331
        %v528 = vunpack.c.l.b16 %v332
        %v529 = vunpack.c.h.b16 %v332
        %v530 = vunpack.c.l.b16 %v333
        %v531 = vunpack.c.h.b16 %v333
        %v532 = vpack.c.b16 %v406, %v404
        %v533 = vpack.c.b16 %v407, %v405
        %v534 = vpack.c.b16 %v410, %v408
        %v535 = vpack.c.b16 %v411, %v409
        %v536 = vpack.c.b16 %v414, %v412
        %v537 = vpack.c.b16 %v415, %v413
        %v538 = vpack.c.b16 %v418, %v416
        %v539 = vpack.c.b16 %v419, %v417
        %v540 = vpack.c.b16 %v422, %v420
        %v541 = vpack.c.b16 %v423, %v421
        %v542 = vpack.c.b16 %v426, %v424
        %v543 = vpack.c.b16 %v427, %v425
        %v544 = vpack.c.b16 %v430, %v428
        %v545 = vpack.c.b16 %v431, %v429
        %v546 = vpack.c.b16 %v434, %v432
        %v547 = vpack.c.b16 %v435, %v433
        %v548 = vpack.c.b16 %v438, %v436
        %v549 = vpack.c.b16 %v439, %v437
        %v550 = vpack.c.b16 %v442, %v440
        %v551 = vpack.c.b16 %v443, %v441
        %v552 = vpack.c.b16 %v446, %v444
        %v553 = vpack.c.b16 %v447, %v445
        %v554 = vpack.c.b16 %v450, %v448
        %v555 = vpack.c.b16 %v451, %v449
        %v556 = vpack.c.b16 %v454, %v452
        %v557 = vpack.c.b16 %v455, %v453
        %v558 = vpack.c.b16 %v458, %v456
        %v559 = vpack.c.b16 %v459, %v457
        %v560 = vpack.c.b16 %v462, %v460
        %v561 = vpack.c.b16 %v463, %v461
        %v562 = vpack.c.b16 %v466, %v464
        %v563 = vpack.c.b16 %v467, %v465
        %v564 = vpack.c.b16 %v470, %v468
        %v565 = vpack.c.b16 %v471, %v469
        %v566 = vpack.c.b16 %v474, %v472
        %v567 = vpack.c.b16 %v475, %v473
        %v568 = vpack.c.b16 %v478, %v476
        %v569 = vpack.c.b16 %v479, %v477
        %v570 = vpack.c.b16 %v482, %v480
        %v571 = vpack.c.b16 %v483, %v481
        %v572 = vpack.c.b16 %v486, %v484
        %v573 = vpack.c.b16 %v487, %v485
        %v574 = vpack.c.b16 %v490, %v488
        %v575 = vpack.c.b16 %v491, %v489
        %v576 = vpack.c.b16 %v494, %v492
        %v577 = vpack.c.b16 %v495, %v493
        %v578 = vpack.c.b16 %v498, %v496
        %v579 = vpack.c.b16 %v499, %v497
        %v580 = vpack.c.b16 %v502, %v500
        %v581 = vpack.c.b16 %v503, %v501
        %v582 = vpack.c.b16 %v506, %v504
        %v583 = vpack.c.b16 %v507, %v505
        %v584 = vpack.c.b16 %v510, %v508
        %v585 = vpack.c.b16 %v511, %v509
        %v586 = vpack.c.b16 %v514, %v512
        %v587 = vpack.c.b16 %v515, %v513
        %v588 = vpack.c.b16 %v518, %v516
        %v589 = vpack.c.b16 %v519, %v517
        %v590 = vpack.c.b16 %v522, %v520
        %v591 = vpack.c.b16 %v523, %v521
        %v592 = vpack.c.b16 %v526, %v524
        %v593 = vpack.c.b16 %v527, %v525
        %v594 = vpack.c.b16 %v530, %v528
        %v595 = vpack.c.b16 %v531, %v529
        %660 = vmatpush.bf16.msra.mxu0 %v546
        %661 = vmatpush.bf16.msra.mxu0 %v544
        %662 = vmatpush.bf16.msra.mxu0 %v542
        %663 = vmatpush.bf16.msra.mxu0 %v540
        %664 = vmatpush.bf16.msra.mxu0 %v538
        %665 = vmatpush.bf16.msra.mxu0 %v536
        %666 = vmatpush.bf16.msra.mxu0 %v534
        %667 = vmatpush.bf16.msra.mxu0 %v532
        %668 = vmatmul.bf16.gmra.mxu0 %v266
        %v669 = vpop.f32.mrf.mxu0
        %v670 = vadd.f32 %v336, %v669
        %v671 = vpop.f32.mrf.mxu0
        %672 = vdwg.mxu0
        %673 = vmatpush.bf16.msra.mxu0 %v562
        %674 = vmatpush.bf16.msra.mxu0 %v560
        %675 = vmatpush.bf16.msra.mxu0 %v558
        %676 = vmatpush.bf16.msra.mxu0 %v556
        %677 = vmatpush.bf16.msra.mxu0 %v554
        %678 = vmatpush.bf16.msra.mxu0 %v552
        %679 = vmatpush.bf16.msra.mxu0 %v550
        %680 = vmatpush.bf16.msra.mxu0 %v548
        %681 = vmatmul.bf16.gmra.mxu0 %v267
        %v682 = vpop.f32.mrf.mxu0
        %v683 = vadd.f32 %v670, %v682
        %v684 = vpop.f32.mrf.mxu0
        %685 = vdwg.mxu0
        %686 = vmatpush.bf16.msra.mxu0 %v578
        %687 = vmatpush.bf16.msra.mxu0 %v576
        %688 = vmatpush.bf16.msra.mxu0 %v574
        %689 = vmatpush.bf16.msra.mxu0 %v572
        %690 = vmatpush.bf16.msra.mxu0 %v570
        %691 = vmatpush.bf16.msra.mxu0 %v568
        %692 = vmatpush.bf16.msra.mxu0 %v566
        %693 = vmatpush.bf16.msra.mxu0 %v564
        %694 = vmatmul.bf16.gmra.mxu0 %v268
        %v695 = vpop.f32.mrf.mxu0
        %v696 = vadd.f32 %v683, %v695
        %v697 = vpop.f32.mrf.mxu0
        %698 = vdwg.mxu0
        %699 = vmatpush.bf16.msra.mxu0 %v594
        %700 = vmatpush.bf16.msra.mxu0 %v592
        %701 = vmatpush.bf16.msra.mxu0 %v590
        %702 = vmatpush.bf16.msra.mxu0 %v588
        %703 = vmatpush.bf16.msra.mxu0 %v586
        %704 = vmatpush.bf16.msra.mxu0 %v584
        %705 = vmatpush.bf16.msra.mxu0 %v582
        %706 = vmatpush.bf16.msra.mxu0 %v580
        %707 = vmatmul.bf16.gmra.mxu0 %v269
        %v708 = vpop.f32.mrf.mxu0
        %v709 = vadd.f32 %v696, %v708
        %v710 = vpop.f32.mrf.mxu0
        %711 = vdwg.mxu0
        %712 = vmatpush.bf16.msra.mxu0 %v547
        %713 = vmatpush.bf16.msra.mxu0 %v545
        %714 = vmatpush.bf16.msra.mxu0 %v543
        %715 = vmatpush.bf16.msra.mxu0 %v541
        %716 = vmatpush.bf16.msra.mxu0 %v539
        %717 = vmatpush.bf16.msra.mxu0 %v537
        %718 = vmatpush.bf16.msra.mxu0 %v535
        %719 = vmatpush.bf16.msra.mxu0 %v533
        %720 = vmatmul.bf16.gmra.mxu0 %v266
        %v721 = vpop.f32.mrf.mxu0
        %v722 = vadd.f32 %v337, %v721
        %v723 = vpop.f32.mrf.mxu0
        %724 = vdwg.mxu0
        %725 = vmatpush.bf16.msra.mxu0 %v563
        %726 = vmatpush.bf16.msra.mxu0 %v561
        %727 = vmatpush.bf16.msra.mxu0 %v559
        %728 = vmatpush.bf16.msra.mxu0 %v557
        %729 = vmatpush.bf16.msra.mxu0 %v555
        %730 = vmatpush.bf16.msra.mxu0 %v553
        %731 = vmatpush.bf16.msra.mxu0 %v551
        %732 = vmatpush.bf16.msra.mxu0 %v549
        %733 = vmatmul.bf16.gmra.mxu0 %v267
        %v734 = vpop.f32.mrf.mxu0
        %v735 = vadd.f32 %v722, %v734
        %v736 = vpop.f32.mrf.mxu0
        %737 = vdwg.mxu0
        %738 = vmatpush.bf16.msra.mxu0 %v579
        %739 = vmatpush.bf16.msra.mxu0 %v577
        %740 = vmatpush.bf16.msra.mxu0 %v575
        %741 = vmatpush.bf16.msra.mxu0 %v573
        %742 = vmatpush.bf16.msra.mxu0 %v571
        %743 = vmatpush.bf16.msra.mxu0 %v569
        %744 = vmatpush.bf16.msra.mxu0 %v567
        %745 = vmatpush.bf16.msra.mxu0 %v565
        %746 = vmatmul.bf16.gmra.mxu0 %v268
        %v747 = vpop.f32.mrf.mxu0
        %v748 = vadd.f32 %v735, %v747
        %v749 = vpop.f32.mrf.mxu0
        %750 = vdwg.mxu0
        %751 = vmatpush.bf16.msra.mxu0 %v595
        %752 = vmatpush.bf16.msra.mxu0 %v593
        %753 = vmatpush.bf16.msra.mxu0 %v591
        %754 = vmatpush.bf16.msra.mxu0 %v589
        %755 = vmatpush.bf16.msra.mxu0 %v587
        %756 = vmatpush.bf16.msra.mxu0 %v585
        %757 = vmatpush.bf16.msra.mxu0 %v583
        %758 = vmatpush.bf16.msra.mxu0 %v581
        %759 = vmatmul.bf16.gmra.mxu0 %v269
        %v760 = vpop.f32.mrf.mxu0
        %v761 = vadd.f32 %v748, %v760
        %v762 = vpop.f32.mrf.mxu0
        %763 = vdwg.mxu0
        %v764 = vmax.f32 %v709, 0.0
        %v765 = vmax.f32 %v761, 0.0
        %v766 = vld [vmem:[%s3] sm:$0x3]
        %v768 = vperm.slane %v766, 0
        %v769 = vperm.slane %v766, 1
        %v772 = vmul.f32 %v764, %v768
        %v773 = vmul.f32 %v765, %v769
        %v774 = vadd.f32 %v772, %v773
        %775 = vadd.xlane.f32.xlu0 %v774
        %v776 = vpop.xlane.xlu0 %775
        %v777 = vld [vmem:[#allocation2] sm:$0x1]
        %v779 = vperm.slane %v777, 0
        %v781 = vadd.f32 %v776, %v779
        %vm782 = vcmask 7168
        %783 = vst.msk [vmem:[%s261] sm:$0xff] %vm782, %v781
        %p784 = scmp.lt.s32.totalorder %s22, 2
        %s785 = scalar_select %p784, %s22, 2
        %s786 = smul.addr %s785, 8
        %s787 = scalar_lea.vmem %s5, %s786
        // Predicated region
        $region49: #{_forward_impl.1} parent=39 // pred_check
          %p788 = pneg %p150
        $region50: #{_forward_impl.1} parent=39 // pred_check_branch
          %790 = sbr.rel (%p788) target = $region52
        $region51: #{_forward_impl.1} parent=39 // pred_region
          _
        $region52: #{_forward_impl.1} parent=39 // pred_fallthru
          _
      $region40: #{_forward_impl.1} parent=5 // pred_fallthru
        _
      %p791 = scmp.le.s32.totalorder 2, %s17
      // Predicated region
      $region53: #{_forward_impl.1} parent=5 // pred_check
        %p792 = pneg %p791
      $region54: #{_forward_impl.1} parent=5 // pred_check_branch
        %794 = sbr.rel (%p792) target = $region56
      $region55: #{_forward_impl.1} parent=5 // pred_region
        %s795 = ssub.s32 %s17, 2
        // Predicated region
        $region57: #{_forward_impl.1} parent=55 // pred_check
          %p796 = pneg %p156
        $region58: #{_forward_impl.1} parent=55 // pred_check_branch
          %798 = sbr.rel (%p796) target = $region60
        $region59: #{_forward_impl.1} parent=55 // pred_region
          %p799 = scmp.lt.s32.totalorder %s23, 2
          %s800 = scalar_select %p799, %s23, 2
          %s801 = smul.addr %s800, 8
          %s802 = scalar_lea.vmem %s5, %s801
        $region60: #{_forward_impl.1} parent=55 // pred_fallthru
          _
      $region56: #{_forward_impl.1} parent=5 // pred_fallthru
        _
    $region6: #{_forward_impl.1} parent=1 // loop_footer
      %s21 = sadd.s32 1, %s17
    $region7: #{_forward_impl.1} parent=1 // loop_footer_branch
      %16 = sbr.rel target = $region3
    $region8: #{_forward_impl.1} parent=1 // loop_exit
      _
    %803 = vsyncpa [#allocation4], 1
    %s804 = scalar_lea.sflag [#allocation4], 1
    %805 = vsyncpa %s804, 1
    %806 = vsyncpa [#allocation6], 1

</llo_original>
